<compile_context>
chip_gen: v7x
topology: tpu7x:2x2x1
jax: 0.10.0
libtpu: 0.0.40
codegen_flags: <defaults>
</compile_context>

<pallas_src>
import jax
import jax.numpy as jnp
from jax.experimental import pallas as pl
from jax.experimental.pallas import tpu as pltpu

_LANE = 1024                       # fixed lane-dense width (multiple of 128)
_NUM_SHARDS = 2                    # leading "parallel" grid axis (v7x: 1 per TC)
_LOG_EPS = -27.631021115928547     # log(1e-12) == torch.clamp(pred, 1e-12) on the log


def _round_up(x, m):
    return (x + m - 1) // m * m


# ---------------------------------------------------------------------------
# Kernels: each emits two per-shard lane-vector partial sums.  All scalar
# combine math happens in the wrapper.
# ---------------------------------------------------------------------------
def _focal_partial_kernel(x_ref, gt_ref, loss_ref, npos_ref):
    i = pl.program_id(1)

    @pl.when(i == 0)
    def _init():
        loss_ref[...] = jnp.zeros_like(loss_ref)
        npos_ref[...] = jnp.zeros_like(npos_ref)

    x = x_ref[...].astype(jnp.float32)
    gt = gt_ref[...].astype(jnp.float32)

    # Shared-softplus path (exp + log + div instead of sigmoid + 2 logs):
    #   sp = softplus(-x);  log(sigmoid(x)) = -sp;  log(1 - sigmoid(x)) = -(x + sp)
    e = jnp.exp(-jnp.abs(x))
    sp = jnp.log(1.0 + e) + jnp.maximum(-x, 0.0)
    pred = jnp.where(x >= 0.0, 1.0, e) / (1.0 + e)
    log_pred = jnp.maximum(-sp, _LOG_EPS)          # == log(clamp(sigmoid(x), 1e-12))
    log_one_minus_pred = -(x + sp)                 # no log(0) = -inf hazard

    is_pos = gt == 1.0
    one_minus_pred = 1.0 - pred
    neg_w_sqrt = (1.0 - gt) * (1.0 - gt)
    loss_elem = jnp.where(
        is_pos,
        log_pred * one_minus_pred * one_minus_pred,
        log_one_minus_pred * pred * pred * neg_w_sqrt * neg_w_sqrt,
    )

    # Per-step: sublane reduce + lane-vector accumulate into the resident
    # output block; cross-lane reduce deferred to the wrapper.
    loss_ref[0:1, :] += jnp.sum(loss_elem, axis=0, keepdims=True)
    npos_ref[0:1, :] += jnp.sum(is_pos.astype(jnp.float32), axis=0, keepdims=True)


def _l1_partial_kernel(p_ref, l_ref, absdiff_ref, mask_ref):
    i = pl.program_id(1)

    @pl.when(i == 0)
    def _init():
        absdiff_ref[...] = jnp.zeros_like(absdiff_ref)
        mask_ref[...] = jnp.zeros_like(mask_ref)

    p = p_ref[...].astype(jnp.float32)
    l = l_ref[...].astype(jnp.float32)
    m = (l > 0.0).astype(jnp.float32)

    absdiff_ref[0:1, :] += jnp.sum(jnp.abs(p - l) * m, axis=0, keepdims=True)
    mask_ref[0:1, :] += jnp.sum(m, axis=0, keepdims=True)


# ---------------------------------------------------------------------------
# Streaming driver shared by both kernels.
# ---------------------------------------------------------------------------
def _vmem_budget():
    """Per-generation VMEM limit and per-input, per-buffer tile byte budget."""
    try:
        vmem_cap = int(pltpu.get_tpu_info().vmem_capacity_bytes)
    except Exception:
        vmem_cap = 64 * 1024 * 1024            # conservative (v7x per-TC VMEM)
    vmem_limit = max(32 << 20, min(vmem_cap - (16 << 20), 96 << 20))
    # 2 streamed inputs x 2 pipeline buffers, headroom for accumulators/scratch.
    tile_bytes = max(256 << 10, min((vmem_limit - (8 << 20)) // 4, 8 << 20))
    return vmem_limit, tile_bytes


def _pick_tile_rows(rows, lane, itemsize, max_tile_bytes, num_shards):
    max_rows = max(8, (max_tile_bytes // max(lane * itemsize, 1)) // 8 * 8)
    tile = min(max_rows, _round_up(rows, 8))
    # Shrink the tile if row padding would exceed ~12.5% of the real rows.
    while tile > 8 and (_round_up(rows, num_shards * tile) - rows) * 8 > rows:
        tile = max(8, (tile // 2) // 8 * 8)
    return tile


def _streaming_partials(kernel, a, b, pad_a, pad_b, *, lane, num_shards,
                        max_tile_bytes, vmem_limit_bytes,
                        flops_per_elem, transcendentals_per_elem):
    """Stream (a, b) as lane-dense (rows, lane) tiles through `kernel`; the
    kernel accumulates two per-shard lane-vector partials which are summed to
    scalars here (tiny XLA reduce over (num_shards*8, lane))."""
    n = int(a.size)
    a_flat = a.reshape(-1)
    b_flat = b.reshape(-1)
    itemsize = max(a_flat.dtype.itemsize, b_flat.dtype.itemsize)

    rows = -(-n // lane)
    tile_rows = _pick_tile_rows(rows, lane, itemsize, max_tile_bytes, num_shards)
    rows_pad = _round_up(rows, num_shards * tile_rows)
    total = rows_pad * lane
    if total != n:
        a_flat = jnp.pad(a_flat, (0, total - n), constant_values=pad_a)
        b_flat = jnp.pad(b_flat, (0, total - n), constant_values=pad_b)
    a2 = a_flat.reshape(rows_pad, lane)
    b2 = b_flat.reshape(rows_pad, lane)

    steps = rows_pad // (num_shards * tile_rows)
    in_spec = pl.BlockSpec((tile_rows, lane), lambda c, i: (c * steps + i, 0))
    out_spec = pl.BlockSpec((8, lane), lambda c, i: (c, 0))   # resident accumulator

    cost = pl.CostEstimate(
        flops=flops_per_elem * total,
        transcendentals=transcendentals_per_elem * total,
        bytes_accessed=2 * total * itemsize + 2 * num_shards * 8 * lane * 4,
    )

    out0, out1 = pl.pallas_call(
        kernel,
        out_shape=(jax.ShapeDtypeStruct((num_shards * 8, lane), jnp.float32),
                   jax.ShapeDtypeStruct((num_shards * 8, lane), jnp.float32)),
        grid_spec=pltpu.PrefetchScalarGridSpec(
            num_scalar_prefetch=0,
            grid=(num_shards, steps),
            in_specs=[in_spec, in_spec],
            out_specs=[out_spec, out_spec],
        ),
        compiler_params=pltpu.CompilerParams(
            dimension_semantics=("parallel", "arbitrary"),
            vmem_limit_bytes=vmem_limit_bytes,
        ),
        cost_estimate=cost,
    )(a2, b2)
    return jnp.sum(out0), jnp.sum(out1)


# ---------------------------------------------------------------------------
# Public entry point (mirrors CenterNetLoss.forward).
# ---------------------------------------------------------------------------
def centernet_loss(prediction_features, prediction_sizemap, prediction_offsetmap,
                   label_heatmap, label_sizemap, label_offsetmap,
                   alpha=1.0, gamma=1.0, beta=0.1,
                   lane=_LANE, num_shards=_NUM_SHARDS, max_tile_bytes=None):
    # gamma / beta are accepted but unused by the reference forward (parity).
    vmem_limit, derived_tile = _vmem_budget()
    if max_tile_bytes is None:
        max_tile_bytes = derived_tile
    common = dict(lane=lane, num_shards=num_shards,
                  max_tile_bytes=max_tile_bytes, vmem_limit_bytes=vmem_limit)

    # Focal partials.  Padding uses (logit=-100, gt=0): exactly zero loss and
    # zero num_pos under the softplus formulation (no clamp tricks needed).
    loss_sum, num_pos = _streaming_partials(
        _focal_partial_kernel, prediction_features, label_heatmap,
        pad_a=-100.0, pad_b=0.0,
        flops_per_elem=20, transcendentals_per_elem=3, **common)
    # pos_loss is identically 0 when num_pos == 0, so the reference's
    # `if num_pos == 0: loss = -neg_loss` branch collapses into one divide.
    focal = -loss_sum / jnp.maximum(num_pos, 1.0)

    # Size / offset L1 partials (zero padding -> mask 0 -> no contribution).
    size_abs, size_cnt = _streaming_partials(
        _l1_partial_kernel, prediction_sizemap, label_sizemap,
        pad_a=0.0, pad_b=0.0,
        flops_per_elem=5, transcendentals_per_elem=0, **common)
    off_abs, off_cnt = _streaming_partials(
        _l1_partial_kernel, prediction_offsetmap, label_offsetmap,
        pad_a=0.0, pad_b=0.0,
        flops_per_elem=5, transcendentals_per_elem=0, **common)

    size_loss = size_abs / (size_cnt + jnp.float32(0.0001))
    offset_loss = off_abs / (off_cnt + jnp.float32(0.0001))
    return focal * jnp.float32(alpha) + size_loss + offset_loss


# ---------------------------------------------------------------------------
# Pure-JAX reference (mirrors the PyTorch module) + self-test.
# ---------------------------------------------------------------------------
def _reference(pf, ps, po, lh, ls, lo, alpha=1.0):
    pred = jax.nn.sigmoid(pf.astype(jnp.float32))
    gt = lh.astype(jnp.float32)
    pos = (gt == 1.0).astype(jnp.float32)
    neg = (gt < 1.0).astype(jnp.float32)
    nw = (1.0 - gt) ** 4
    pred = jnp.maximum(pred, 1e-12)
    pos_l = jnp.sum(jnp.log(pred) * (1.0 - pred) ** 2 * pos)
    neg_l = jnp.sum(jnp.log(1.0 - pred) * pred ** 2 * nw * neg)
    npos = jnp.sum(pos)
    focal = jnp.where(npos == 0, -neg_l, -(pos_l + neg_l) / jnp.maximum(npos, 1.0))

    def l1(p, l):
        m = (l > 0).astype(jnp.float32)
        return jnp.sum(jnp.abs(p.astype(jnp.float32) - l.astype(jnp.float32)) * m) / (jnp.sum(m) + 0.0001)

    return focal * alpha + l1(ps, ls) + l1(po, lo)


if __name__ == "__main__":
    key = jax.random.PRNGKey(0)
    k = jax.random.split(key, 6)

    def make_inputs(B, C, H, W, R=2):
        pf = jax.random.normal(k[0], (B, C, H, W), jnp.float32)          # logits
        lh = jnp.clip(jax.random.uniform(k[1], (B, C, H, W), jnp.float32), 0.0, 0.99)
        lh = lh.at[:, :, 4, 4].set(1.0)                                  # positive centers
        ps = jax.random.normal(k[2], (B, R, H, W), jnp.float32)
        po = jax.random.normal(k[3], (B, R, H, W), jnp.float32)
        ls = jnp.where(jax.random.uniform(k[4], (B, R, H, W)) > 0.9,
                       jax.random.uniform(k[4], (B, R, H, W)) * 10.0, 0.0).astype(jnp.float32)
        lo = jnp.where(jax.random.uniform(k[5], (B, R, H, W)) > 0.9,
                       jax.random.uniform(k[5], (B, R, H, W)), 0.0).astype(jnp.float32)
        return pf, ps, po, lh, ls, lo

    # Case 1: default lane/tile derivation (single step per shard + padding).
    args = make_inputs(2, 4, 16, 16)
    loss = jax.block_until_ready(centernet_loss(*args))
    ref = _reference(*args)
    assert jnp.allclose(loss, ref, rtol=1e-4, atol=1e-4), (loss, ref)

    # Case 2: force a multi-step grid + row padding (small lane / tiny tiles).
    args2 = make_inputs(2, 5, 16, 16)
    loss2 = jax.block_until_ready(
        centernet_loss(*args2, lane=128, max_tile_bytes=8 * 1024))
    ref2 = _reference(*args2)
    assert jnp.allclose(loss2, ref2, rtol=1e-4, atol=1e-4), (loss2, ref2)

    print("KERNEL_OK")
</pallas_src>

<mosaic_0001>
module attributes {stable_mosaic.version = 11 : i64} {
  func.func @_focal_partial_kernel(%arg0: i32, %arg1: i32, %arg2: memref<8x1024xf32, #tpu.memory_space<vmem>>, %arg3: memref<8x1024xf32, #tpu.memory_space<vmem>>, %arg4: memref<8x1024xf32, #tpu.memory_space<vmem>>, %arg5: memref<8x1024xf32, #tpu.memory_space<vmem>>) attributes {dimension_semantics = [#tpu.dimension_semantics<parallel>, #tpu.dimension_semantics<arbitrary>], iteration_bounds = array<i64: 2, 1>, scalar_prefetch = 0 : i64, scratch_operands = 0 : i64, tpu.core_type = #tpu.core_type<tc>, window_params = [{transform_indices = @transform_0, window_bounds = array<i64: 8, 1024>}, {transform_indices = @transform_1, window_bounds = array<i64: 8, 1024>}, {transform_indices = @transform_2, window_bounds = array<i64: 8, 1024>}, {transform_indices = @transform_3, window_bounds = array<i64: 8, 1024>}]} {
    %c0_i32 = arith.constant 0 : i32
    %0 = arith.cmpi eq, %arg1, %c0_i32 : i32
    %1 = arith.extui %0 : i1 to i32
    %c0_i32_0 = arith.constant 0 : i32
    %2 = arith.cmpi ne, %1, %c0_i32_0 : i32
    scf.if %2 {
      %cst_27 = arith.constant 0.000000e+00 : f32
      %59 = vector.broadcast %cst_27 : f32 to vector<8x1024xf32>
      %c0_28 = arith.constant 0 : index
      %c0_29 = arith.constant 0 : index
      %60 = vector.load %arg4[%c0_28, %c0_29] : memref<8x1024xf32, #tpu.memory_space<vmem>>, vector<8x1024xf32>
      tpu.vector_store %arg4[%c0_28, %c0_29], %59 {strides = array<i32>} : memref<8x1024xf32, #tpu.memory_space<vmem>>, vector<8x1024xf32>,
      %cst_30 = arith.constant 0.000000e+00 : f32
      %61 = vector.broadcast %cst_30 : f32 to vector<8x1024xf32>
      %c0_31 = arith.constant 0 : index
      %c0_32 = arith.constant 0 : index
      %62 = vector.load %arg5[%c0_31, %c0_32] : memref<8x1024xf32, #tpu.memory_space<vmem>>, vector<8x1024xf32>
      tpu.vector_store %arg5[%c0_31, %c0_32], %61 {strides = array<i32>} : memref<8x1024xf32, #tpu.memory_space<vmem>>, vector<8x1024xf32>,
    } else {
    }
    %c0 = arith.constant 0 : index
    %c0_1 = arith.constant 0 : index
    %3 = vector.load %arg2[%c0, %c0_1] : memref<8x1024xf32, #tpu.memory_space<vmem>>, vector<8x1024xf32>
    %c0_2 = arith.constant 0 : index
    %c0_3 = arith.constant 0 : index
    %4 = vector.load %arg3[%c0_2, %c0_3] : memref<8x1024xf32, #tpu.memory_space<vmem>>, vector<8x1024xf32>
    %5 = math.absf %3 : vector<8x1024xf32>
    %cst = arith.constant 0.000000e+00 : f32
    %6 = vector.broadcast %cst : f32 to vector<8x1024xf32>
    %7 = arith.subf %6, %5 : vector<8x1024xf32>
    %8 = math.exp %7 : vector<8x1024xf32>
    %cst_4 = arith.constant 1.000000e+00 : f32
    %9 = vector.broadcast %cst_4 : f32 to vector<8x1024xf32>
    %10 = arith.addf %9, %8 : vector<8x1024xf32>
    %11 = math.log %10 : vector<8x1024xf32>
    %cst_5 = arith.constant 0.000000e+00 : f32
    %12 = vector.broadcast %cst_5 : f32 to vector<8x1024xf32>
    %13 = arith.subf %12, %3 : vector<8x1024xf32>
    %cst_6 = arith.constant 0.000000e+00 : f32
    %14 = vector.broadcast %cst_6 : f32 to vector<8x1024xf32>
    %15 = arith.maximumf %13, %14 : vector<8x1024xf32>
    %16 = arith.addf %11, %15 : vector<8x1024xf32>
    %cst_7 = arith.constant 0.000000e+00 : f32
    %17 = vector.broadcast %cst_7 : f32 to vector<8x1024xf32>
    %18 = arith.cmpf oge, %3, %17 : vector<8x1024xf32>
    %cst_8 = arith.constant 1.000000e+00 : f32
    %19 = vector.broadcast %cst_8 : f32 to vector<8x1024xf32>
    %20 = arith.select %18, %19, %8 : vector<8x1024xi1>, vector<8x1024xf32>
    %cst_9 = arith.constant 1.000000e+00 : f32
    %21 = vector.broadcast %cst_9 : f32 to vector<8x1024xf32>
    %22 = arith.addf %21, %8 : vector<8x1024xf32>
    %23 = arith.divf %20, %22 : vector<8x1024xf32>
    %cst_10 = arith.constant 0.000000e+00 : f32
    %24 = vector.broadcast %cst_10 : f32 to vector<8x1024xf32>
    %25 = arith.subf %24, %16 : vector<8x1024xf32>
    %cst_11 = arith.constant -27.6310215 : f32
    %26 = vector.broadcast %cst_11 : f32 to vector<8x1024xf32>
    %27 = arith.maximumf %25, %26 : vector<8x1024xf32>
    %28 = arith.addf %3, %16 : vector<8x1024xf32>
    %cst_12 = arith.constant 0.000000e+00 : f32
    %29 = vector.broadcast %cst_12 : f32 to vector<8x1024xf32>
    %30 = arith.subf %29, %28 : vector<8x1024xf32>
    %cst_13 = arith.constant 1.000000e+00 : f32
    %31 = vector.broadcast %cst_13 : f32 to vector<8x1024xf32>
    %32 = arith.cmpf oeq, %4, %31 : vector<8x1024xf32>
    %cst_14 = arith.constant 1.000000e+00 : f32
    %33 = vector.broadcast %cst_14 : f32 to vector<8x1024xf32>
    %34 = arith.subf %33, %23 : vector<8x1024xf32>
    %cst_15 = arith.constant 1.000000e+00 : f32
    %35 = vector.broadcast %cst_15 : f32 to vector<8x1024xf32>
    %36 = arith.subf %35, %4 : vector<8x1024xf32>
    %cst_16 = arith.constant 1.000000e+00 : f32
    %37 = vector.broadcast %cst_16 : f32 to vector<8x1024xf32>
    %38 = arith.subf %37, %4 : vector<8x1024xf32>
    %39 = arith.mulf %36, %38 : vector<8x1024xf32>
    %40 = arith.mulf %27, %34 : vector<8x1024xf32>
    %41 = arith.mulf %40, %34 : vector<8x1024xf32>
    %42 = arith.mulf %30, %23 : vector<8x1024xf32>
    %43 = arith.mulf %42, %23 : vector<8x1024xf32>
    %44 = arith.mulf %43, %39 : vector<8x1024xf32>
    %45 = arith.mulf %44, %39 : vector<8x1024xf32>
    %46 = arith.select %32, %41, %45 : vector<8x1024xi1>, vector<8x1024xf32>
    %c0_17 = arith.constant 0 : index
    %c0_18 = arith.constant 0 : index
    %47 = vector.load %arg4[%c0_17, %c0_18] : memref<8x1024xf32, #tpu.memory_space<vmem>>, vector<1x1024xf32>
    %cst_19 = arith.constant dense<0.000000e+00> : vector<1024xf32>
    %48 = vector.multi_reduction <add>, %46, %cst_19 [0] : vector<8x1024xf32> to vector<1024xf32>
    %49 = vector.shape_cast %48 : vector<1024xf32> to vector<1x1024xf32>
    %50 = arith.addf %47, %49 : vector<1x1024xf32>
    %c0_20 = arith.constant 0 : index
    %c0_21 = arith.constant 0 : index
    %51 = vector.load %arg4[%c0_20, %c0_21] : memref<8x1024xf32, #tpu.memory_space<vmem>>, vector<1x1024xf32>
    tpu.vector_store %arg4[%c0_20, %c0_21], %50 {strides = array<i32>} : memref<8x1024xf32, #tpu.memory_space<vmem>>, vector<1x1024xf32>,
    %c0_22 = arith.constant 0 : index
    %c0_23 = arith.constant 0 : index
    %52 = vector.load %arg5[%c0_22, %c0_23] : memref<8x1024xf32, #tpu.memory_space<vmem>>, vector<1x1024xf32>
    %53 = arith.extui %32 : vector<8x1024xi1> to vector<8x1024xi32>
    %54 = arith.sitofp %53 : vector<8x1024xi32> to vector<8x1024xf32>
    %cst_24 = arith.constant dense<0.000000e+00> : vector<1024xf32>
    %55 = vector.multi_reduction <add>, %54, %cst_24 [0] : vector<8x1024xf32> to vector<1024xf32>
    %56 = vector.shape_cast %55 : vector<1024xf32> to vector<1x1024xf32>
    %57 = arith.addf %52, %56 : vector<1x1024xf32>
    %c0_25 = arith.constant 0 : index
    %c0_26 = arith.constant 0 : index
    %58 = vector.load %arg5[%c0_25, %c0_26] : memref<8x1024xf32, #tpu.memory_space<vmem>>, vector<1x1024xf32>
    tpu.vector_store %arg5[%c0_25, %c0_26], %57 {strides = array<i32>} : memref<8x1024xf32, #tpu.memory_space<vmem>>, vector<1x1024xf32>,
    return
  }
  func.func @transform_0(%arg0: i32, %arg1: i32) -> (i32, i32) {
    %c1_i32 = arith.constant 1 : i32
    %0 = arith.muli %arg0, %c1_i32 : i32
    %1 = arith.addi %0, %arg1 : i32
    %c0_i32 = arith.constant 0 : i32
    %c0_i32_0 = arith.constant 0 : i32
    return %1, %c0_i32 : i32, i32
  }
  func.func @transform_1(%arg0: i32, %arg1: i32) -> (i32, i32) {
    %c1_i32 = arith.constant 1 : i32
    %0 = arith.muli %arg0, %c1_i32 : i32
    %1 = arith.addi %0, %arg1 : i32
    %c0_i32 = arith.constant 0 : i32
    %c0_i32_0 = arith.constant 0 : i32
    return %1, %c0_i32 : i32, i32
  }
  func.func @transform_2(%arg0: i32, %arg1: i32) -> (i32, i32) {
    %c0_i32 = arith.constant 0 : i32
    %c0_i32_0 = arith.constant 0 : i32
    return %arg0, %c0_i32 : i32, i32
  }
  func.func @transform_3(%arg0: i32, %arg1: i32) -> (i32, i32) {
    %c0_i32 = arith.constant 0 : i32
    %c0_i32_0 = arith.constant 0 : i32
    return %arg0, %c0_i32 : i32, i32
  }
}

</mosaic_0001>

<llo_original>
// kernel: tpu_custom_call.1
$region0: #{tpu_custom_call.1}
  #allocation0 [shape = 'u32[]', space=smem, size = 0x4, offset = 0x4, fixed_abs, tag = 'smem constant byte address 0x4 - core index']
  #allocation1 [shape = 'u32[144,128]{1,0:T(1,128)}', space=vmem, size = 0x12000, scoped, tag = 'internal scratch']
  %s0 = inlined_call_operand.hbm [shape: f32[16,1024], index: 0, kind: input, shape index: {}]
  %s1 = inlined_call_operand.hbm [shape: f32[16,1024], index: 1, kind: input, shape index: {}]
  %s2 = inlined_call_operand.hbm [shape: f32[16,1024], index: 2, kind: output, shape index: {0}]
  %s3 = inlined_call_operand.hbm [shape: f32[16,1024], index: 3, kind: output, shape index: {1}]
  %4 = xla_tuple %s2, %s3
  %s5 = sld [smem:[#allocation0]]
  $region61: #{tpu_custom_call.1} parent=0
    _
  %s7 = ssub.s32 1, %s5
  %s8 = scalar_select 0, %s7, %s5
  $region1: #{tpu_custom_call.1} parent=0
    #allocation2 [shape = 'u8[65536]{0}', space=vmem, size = 0x10000, scoped, tag = 'input window, operand 0']
    #allocation3 [shape = 's32[2]{0}', space=sflag, size = 0x8, scoped, tag = 'scoped memory for tpu_custom_call.1']
    #allocation4 [shape = 's32[2]{0}', space=sflag, size = 0x8, scoped, tag = 'scoped memory for tpu_custom_call.1']
    #allocation5 [shape = 'u8[65536]{0}', space=vmem, size = 0x10000, scoped, tag = 'input window, operand 1']
    #allocation6 [shape = 's32[2]{0}', space=sflag, size = 0x8, scoped, tag = 'scoped memory for tpu_custom_call.1']
    #allocation7 [shape = 'u8[65536]{0}', space=vmem, size = 0x10000, scoped, tag = 'output window, operand 0']
    #allocation8 [shape = 'u8[65536]{0}', space=vmem, size = 0x10000, scoped, tag = 'output window, operand 1']
    #allocation9 [shape = 's32[2]{0}', space=sflag, size = 0x8, scoped, tag = 'scoped memory for tpu_custom_call.1']
    %9 = vsyncpa [#allocation3], 0
    %s10 = scalar_lea.sflag [#allocation3], 1
    %11 = vsyncpa %s10, 0
    %12 = vsyncpa [#allocation6], 0
    %s13 = scalar_lea.sflag [#allocation6], 1
    %14 = vsyncpa %s13, 0
    %15 = vsyncpa [#allocation4], 0
    %s16 = scalar_lea.sflag [#allocation4], 1
    %17 = vsyncpa %s16, 0
    %18 = vsyncpa [#allocation9], 0
    %s19 = scalar_lea.sflag [#allocation9], 1
    %20 = vsyncpa %s19, 0
    loop: start=0, step=1, limit=4
    $region2: #{tpu_custom_call.1} parent=1 // loop_pre_header
      _
    $region3: #{tpu_custom_call.1} parent=1 // loop_header
      %s22 = sphi 0, %s26
      %p23 = scmp.ge.s32.totalorder %s22, 4
      %s29 = sphi 0, %s41
      %s30 = sphi 0, %s37
      %s31 = sphi 0, %s29
      %s32 = sphi 0, %s30
      %s33 = sphi 0, %s31
      %s34 = sphi 0, %s32
      %s46 = sphi 0, %s48
      %s49 = sphi 0, %s46
      %s50 = sphi 0, %s49
      %s66 = sphi 0, %s50
      %s74 = sphi 0, %s76
      %s77 = sphi 0, %s74
      %s78 = sphi 0, %s77
      %s94 = sphi 0, %s78
      %s100 = sphi 0, %s102
      %s103 = sphi 0, %s100
      %s104 = sphi 0, %s103
      %s120 = sphi 0, %s104
      %s126 = sphi 0, %s128
      %s129 = sphi 0, %s126
      %s130 = sphi 0, %s129
      %s146 = sphi 0, %s130
    $region4: #{tpu_custom_call.1} parent=1 // loop_header_branch
      %25 = sbr.rel (%p23) target = $region8
    $region5: #{tpu_custom_call.1} parent=1 // loop_body
      %s27 = ssub.s32 %s22, 1
      %s28 = ssub.s32 %s22, 2
      %s35 = sadd.s32 1, %s30
      %p36 = scmp.ge.s32.totalorder %s35, 1
      %s37 = scalar_select %p36, 0, %s35
      %s38 = sadd.s32 1, %s29
      %s39 = scalar_select %p36, %s38, %s29
      %p40 = scmp.ge.s32.totalorder %s39, 2
      %s41 = scalar_select %p40, 0, %s39
      %s42 = sadd.s32 %s29, %s30
      %s43 = sadd.s32 %s41, %s37
      %s44 = ssub.s32 %s42, %s43
      %p45 = scmp.eq.s32.totalorder %s44, 0
      %s47 = sadd.s32 %s46, 1
      %s48 = scalar_select %p45, %s46, %s47
      %p51 = pneg %p45
      %p52 = scmp.eq.s32.totalorder %s22, 1
      %p53 = por %p51, %p52
      %p54 = scmp.ne.s32.totalorder %s46, %s49
      %p55 = scmp.eq.s32.totalorder %s22, 0
      %p56 = por %p54, %p55
      %p57 = scmp.ne.s32.totalorder %s46, %s49
      %p58 = scmp.eq.s32.totalorder %s27, 1
      %p59 = por %p57, %p58
      %p60 = scmp.ne.s32.totalorder %s49, %s50
      %p61 = scmp.eq.s32.totalorder %s27, 0
      %p62 = por %p60, %p61
      %p63 = scmp.ne.s32.totalorder %s49, %s50
      %p64 = scmp.eq.s32.totalorder %s28, 1
      %p65 = por %p63, %p64
      %p67 = scmp.ne.s32.totalorder %s50, %s66
      %p68 = scmp.eq.s32.totalorder %s28, 0
      %p69 = por %p67, %p68
      %s70 = sadd.s32 %s29, %s30
      %s71 = sadd.s32 %s41, %s37
      %s72 = ssub.s32 %s70, %s71
      %p73 = scmp.eq.s32.totalorder %s72, 0
      %s75 = sadd.s32 %s74, 1
      %s76 = scalar_select %p73, %s74, %s75
      %p79 = pneg %p73
      %p80 = scmp.eq.s32.totalorder %s22, 1
      %p81 = por %p79, %p80
      %p82 = scmp.ne.s32.totalorder %s74, %s77
      %p83 = scmp.eq.s32.totalorder %s22, 0
      %p84 = por %p82, %p83
      %p85 = scmp.ne.s32.totalorder %s74, %s77
      %p86 = scmp.eq.s32.totalorder %s27, 1
      %p87 = por %p85, %p86
      %p88 = scmp.ne.s32.totalorder %s77, %s78
      %p89 = scmp.eq.s32.totalorder %s27, 0
      %p90 = por %p88, %p89
      %p91 = scmp.ne.s32.totalorder %s77, %s78
      %p92 = scmp.eq.s32.totalorder %s28, 1
      %p93 = por %p91, %p92
      %p95 = scmp.ne.s32.totalorder %s78, %s94
      %p96 = scmp.eq.s32.totalorder %s28, 0
      %p97 = por %p95, %p96
      %s98 = ssub.s32 %s29, %s41
      %p99 = scmp.eq.s32.totalorder %s98, 0
      %s101 = sadd.s32 %s100, 1
      %s102 = scalar_select %p99, %s100, %s101
      %p105 = pneg %p99
      %p106 = scmp.eq.s32.totalorder %s22, 1
      %p107 = por %p105, %p106
      %p108 = scmp.ne.s32.totalorder %s100, %s103
      %p109 = scmp.eq.s32.totalorder %s22, 0
      %p110 = por %p108, %p109
      %p111 = scmp.ne.s32.totalorder %s100, %s103
      %p112 = scmp.eq.s32.totalorder %s27, 1
      %p113 = por %p111, %p112
      %p114 = scmp.ne.s32.totalorder %s103, %s104
      %p115 = scmp.eq.s32.totalorder %s27, 0
      %p116 = por %p114, %p115
      %p117 = scmp.ne.s32.totalorder %s103, %s104
      %p118 = scmp.eq.s32.totalorder %s28, 1
      %p119 = por %p117, %p118
      %p121 = scmp.ne.s32.totalorder %s104, %s120
      %p122 = scmp.eq.s32.totalorder %s28, 0
      %p123 = por %p121, %p122
      %s124 = ssub.s32 %s29, %s41
      %p125 = scmp.eq.s32.totalorder %s124, 0
      %s127 = sadd.s32 %s126, 1
      %s128 = scalar_select %p125, %s126, %s127
      %p131 = pneg %p125
      %p132 = scmp.eq.s32.totalorder %s22, 1
      %p133 = por %p131, %p132
      %p134 = scmp.ne.s32.totalorder %s126, %s129
      %p135 = scmp.eq.s32.totalorder %s22, 0
      %p136 = por %p134, %p135
      %p137 = scmp.ne.s32.totalorder %s126, %s129
      %p138 = scmp.eq.s32.totalorder %s27, 1
      %p139 = por %p137, %p138
      %p140 = scmp.ne.s32.totalorder %s129, %s130
      %p141 = scmp.eq.s32.totalorder %s27, 0
      %p142 = por %p140, %p141
      %p143 = scmp.ne.s32.totalorder %s129, %s130
      %p144 = scmp.eq.s32.totalorder %s28, 1
      %p145 = por %p143, %p144
      %p147 = scmp.ne.s32.totalorder %s130, %s146
      %p148 = scmp.eq.s32.totalorder %s28, 0
      %p149 = por %p147, %p148
      %p150 = scmp.le.s32.totalorder 1, %s22
      %p151 = scmp.lt.s32.totalorder %s22, 3
      %p152 = pnand %p150, %p151
      %p153 = pneg %p152
      // Predicated region
      $region9: #{tpu_custom_call.1} parent=5 // pred_check
        _
      $region10: #{tpu_custom_call.1} parent=5 // pred_check_branch
        %155 = sbr.rel (%p152) target = $region12
      $region11: #{tpu_custom_call.1} parent=5 // pred_region
        %s156 = ssub.s32 %s22, 1
      $region12: #{tpu_custom_call.1} parent=5 // pred_fallthru
        _
      %p157 = scmp.lt.s32.totalorder %s22, 2
      // Predicated region
      $region13: #{tpu_custom_call.1} parent=5 // pred_check
        %p158 = pneg %p157
      $region14: #{tpu_custom_call.1} parent=5 // pred_check_branch
        %160 = sbr.rel (%p158) target = $region16
      $region15: #{tpu_custom_call.1} parent=5 // pred_region
        // Predicated region
        $region17: #{tpu_custom_call.1} parent=15 // pred_check
          %p161 = pneg %p56
        $region18: #{tpu_custom_call.1} parent=15 // pred_check_branch
          %163 = sbr.rel (%p161) target = $region20
        $region19: #{tpu_custom_call.1} parent=15 // pred_region
          %s164 = sand.u32 %s46, 1
          %s165 = scalar_lea.sflag [#allocation3], %s164
          %s166 = sand.u32 %s46, 1
          %s167 = smul.addr %s166, 64
          %s168 = scalar_lea.vmem [#allocation2], %s167
          %s169 = sadd.s32 %s29, %s30
          %s171 = ssub.s32 1024, 1024
          %172 = vsyncadd %s165, %s171
          %s173 = smul.addr %s169, 8
          %s174 = smul.addr %s173, 128
          %s175 = scalar_lea.hbm %s0, %s174
          %s177 = sshll.u32 %s168, 4
          %s178 = int_to_ptr.vmem [resolvable:$true] %s177
          %180 = dma.hbm_to_vmem [thread:$0]  %s175, 1024, %s178, %s165
        $region20: #{tpu_custom_call.1} parent=15 // pred_fallthru
          _
        // Predicated region
        $region21: #{tpu_custom_call.1} parent=15 // pred_check
          %p181 = pneg %p84
        $region22: #{tpu_custom_call.1} parent=15 // pred_check_branch
          %183 = sbr.rel (%p181) target = $region24
        $region23: #{tpu_custom_call.1} parent=15 // pred_region
          %s184 = sand.u32 %s74, 1
          %s185 = scalar_lea.sflag [#allocation6], %s184
          %s186 = sand.u32 %s74, 1
          %s187 = smul.addr %s186, 64
          %s188 = scalar_lea.vmem [#allocation5], %s187
          %s189 = sadd.s32 %s29, %s30
          %s191 = ssub.s32 1024, 1024
          %192 = vsyncadd %s185, %s191
          %s193 = smul.addr %s189, 8
          %s194 = smul.addr %s193, 128
          %s195 = scalar_lea.hbm %s1, %s194
          %s197 = sshll.u32 %s188, 4
          %s198 = int_to_ptr.vmem [resolvable:$true] %s197
          %200 = dma.hbm_to_vmem [thread:$0]  %s195, 1024, %s198, %s185
        $region24: #{tpu_custom_call.1} parent=15 // pred_fallthru
          _
      $region16: #{tpu_custom_call.1} parent=5 // pred_fallthru
        _
      %p201 = scmp.le.s32.totalorder 1, %s22
      %p202 = scmp.lt.s32.totalorder %s22, 3
      %p203 = pnand %p201, %p202
      %p204 = pneg %p203
      // Predicated region
      $region25: #{tpu_custom_call.1} parent=5 // pred_check
        _
      $region26: #{tpu_custom_call.1} parent=5 // pred_check_branch
        %206 = sbr.rel (%p203) target = $region28
      $region27: #{tpu_custom_call.1} parent=5 // pred_region
        %s207 = ssub.s32 %s22, 1
        %s208 = sand.u32 %s49, 1
        %s209 = scalar_lea.sflag [#allocation3], %s208
        %s210 = sand.u32 %s49, 1
        %s211 = smul.addr %s210, 64
        %s212 = scalar_lea.vmem [#allocation2], %s211
        // Predicated region
        $region29: #{tpu_custom_call.1} parent=27 // pred_check
          %p213 = pneg %p62
        $region30: #{tpu_custom_call.1} parent=27 // pred_check_branch
          %215 = sbr.rel (%p213) target = $region32
        $region31: #{tpu_custom_call.1} parent=27 // pred_region
          %216 = dma.done %s209, 1024
        $region32: #{tpu_custom_call.1} parent=27 // pred_fallthru
          _
        %s217 = sand.u32 %s77, 1
        %s218 = scalar_lea.sflag [#allocation6], %s217
        %s219 = sand.u32 %s77, 1
        %s220 = smul.addr %s219, 64
        %s221 = scalar_lea.vmem [#allocation5], %s220
        // Predicated region
        $region33: #{tpu_custom_call.1} parent=27 // pred_check
          %p222 = pneg %p90
        $region34: #{tpu_custom_call.1} parent=27 // pred_check_branch
          %224 = sbr.rel (%p222) target = $region36
        $region35: #{tpu_custom_call.1} parent=27 // pred_region
          %225 = dma.done %s218, 1024
        $region36: #{tpu_custom_call.1} parent=27 // pred_fallthru
          _
        %s226 = sand.u32 %s49, 1
        %s227 = scalar_lea.sflag [#allocation3], %s226
        %s228 = sand.u32 %s49, 1
        %s229 = smul.addr %s228, 64
        %s230 = scalar_lea.vmem [#allocation2], %s229
        %p231 = pneg %p62
        %p232 = pneg %p59
        %s233 = sand.u32 %s77, 1
        %s234 = scalar_lea.sflag [#allocation6], %s233
        %s235 = sand.u32 %s77, 1
        %s236 = smul.addr %s235, 64
        %s237 = scalar_lea.vmem [#allocation5], %s236
        %p238 = pneg %p90
        %p239 = pneg %p87
        %p240 = pneg %p116
        %p241 = pneg %p113
        %s242 = sand.u32 %s103, 1
        %s243 = scalar_lea.sflag [#allocation4], %s242
        %s244 = sand.u32 %s103, 1
        %s245 = smul.addr %s244, 64
        %s246 = scalar_lea.vmem [#allocation7], %s245
        %p247 = pneg %p142
        %p248 = pneg %p139
        %s249 = sand.u32 %s129, 1
        %s250 = scalar_lea.sflag [#allocation9], %s249
        %s251 = sand.u32 %s129, 1
        %s252 = smul.addr %s251, 64
        %s253 = scalar_lea.vmem [#allocation8], %s252
        %s254 = sadd.s32 %s31, %s32
        %s255 = sadd.s32 %s31, %s32
        %p256 = scmp.eq.s32.totalorder %s32, 0
        // Predicated region
        $region37: #{tpu_custom_call.1} parent=27 // pred_check
          %p257 = pneg %p256
        $region38: #{tpu_custom_call.1} parent=27 // pred_check_branch
          %259 = sbr.rel (%p257) target = $region40
        $region39: #{tpu_custom_call.1} parent=27 // pred_region
          %260 = vst [vmem:[%s246] sm:$0xff] 0.0
          %261 = vst [vmem:[%s246 + $0x8] sm:$0xff] 0.0
          %262 = vst [vmem:[%s246 + $0x10] sm:$0xff] 0.0
          %263 = vst [vmem:[%s246 + $0x18] sm:$0xff] 0.0
          %264 = vst [vmem:[%s246 + $0x20] sm:$0xff] 0.0
          %265 = vst [vmem:[%s246 + $0x28] sm:$0xff] 0.0
          %266 = vst [vmem:[%s246 + $0x30] sm:$0xff] 0.0
          %267 = vst [vmem:[%s246 + $0x38] sm:$0xff] 0.0
          %268 = vst [vmem:[%s253] sm:$0xff] 0.0
          %269 = vst [vmem:[%s253 + $0x8] sm:$0xff] 0.0
          %270 = vst [vmem:[%s253 + $0x10] sm:$0xff] 0.0
          %271 = vst [vmem:[%s253 + $0x18] sm:$0xff] 0.0
          %272 = vst [vmem:[%s253 + $0x20] sm:$0xff] 0.0
          %273 = vst [vmem:[%s253 + $0x28] sm:$0xff] 0.0
          %274 = vst [vmem:[%s253 + $0x30] sm:$0xff] 0.0
          %275 = vst [vmem:[%s253 + $0x38] sm:$0xff] 0.0
        $region40: #{tpu_custom_call.1} parent=27 // pred_fallthru
          _
        %v276 = vld [vmem:[%s212] sm:$0xff]
        %v277 = vld [vmem:[%s212 + $0x8] sm:$0xff]
        %v278 = vld [vmem:[%s212 + $0x10] sm:$0xff]
        %v279 = vld [vmem:[%s212 + $0x18] sm:$0xff]
        %v280 = vld [vmem:[%s212 + $0x20] sm:$0xff]
        %v281 = vld [vmem:[%s212 + $0x28] sm:$0xff]
        %v282 = vld [vmem:[%s212 + $0x30] sm:$0xff]
        %v283 = vld [vmem:[%s212 + $0x38] sm:$0xff]
        %v284 = vld [vmem:[%s221] sm:$0xff]
        %v285 = vld [vmem:[%s221 + $0x8] sm:$0xff]
        %v286 = vld [vmem:[%s221 + $0x10] sm:$0xff]
        %v287 = vld [vmem:[%s221 + $0x18] sm:$0xff]
        %v288 = vld [vmem:[%s221 + $0x20] sm:$0xff]
        %v289 = vld [vmem:[%s221 + $0x28] sm:$0xff]
        %v290 = vld [vmem:[%s221 + $0x30] sm:$0xff]
        %v291 = vld [vmem:[%s221 + $0x38] sm:$0xff]
        %v292 = vand.u32 2147483647, %v276
        %v293 = vand.u32 2147483647, %v277
        %v294 = vand.u32 2147483647, %v278
        %v295 = vand.u32 2147483647, %v279
        %v296 = vand.u32 2147483647, %v280
        %v297 = vand.u32 2147483647, %v281
        %v298 = vand.u32 2147483647, %v282
        %v299 = vand.u32 2147483647, %v283
        %v300 = vsub.f32 0.0, %v292
        %v301 = vsub.f32 0.0, %v293
        %v302 = vsub.f32 0.0, %v294
        %v303 = vsub.f32 0.0, %v295
        %v304 = vsub.f32 0.0, %v296
        %v305 = vsub.f32 0.0, %v297
        %v306 = vsub.f32 0.0, %v298
        %v307 = vsub.f32 0.0, %v299
        %v308 = vmul.f32 %v300, 1.442695
        %v309 = vpow.pop %v308
        %v310 = vmul.f32 %v301, 1.442695
        %v311 = vpow.pop %v310
        %v312 = vmul.f32 %v302, 1.442695
        %v313 = vpow.pop %v312
        %v314 = vmul.f32 %v303, 1.442695
        %v315 = vpow.pop %v314
        %v316 = vmul.f32 %v304, 1.442695
        %v317 = vpow.pop %v316
        %v318 = vmul.f32 %v305, 1.442695
        %v319 = vpow.pop %v318
        %v320 = vmul.f32 %v306, 1.442695
        %v321 = vpow.pop %v320
        %v322 = vmul.f32 %v307, 1.442695
        %v323 = vpow.pop %v322
        %v324 = vadd.f32 %v309, 1.0
        %v325 = vadd.f32 %v311, 1.0
        %v326 = vadd.f32 %v313, 1.0
        %v327 = vadd.f32 %v315, 1.0
        %v328 = vadd.f32 %v317, 1.0
        %v329 = vadd.f32 %v319, 1.0
        %v330 = vadd.f32 %v321, 1.0
        %v331 = vadd.f32 %v323, 1.0
        %v332 = vlog2.pop %v324
        %v333 = vmul.f32 %v332, 0.6931472
        %v334 = vlog2.pop %v325
        %v335 = vmul.f32 %v334, 0.6931472
        %v336 = vlog2.pop %v326
        %v337 = vmul.f32 %v336, 0.6931472
        %v338 = vlog2.pop %v327
        %v339 = vmul.f32 %v338, 0.6931472
        %v340 = vlog2.pop %v328
        %v341 = vmul.f32 %v340, 0.6931472
        %v342 = vlog2.pop %v329
        %v343 = vmul.f32 %v342, 0.6931472
        %v344 = vlog2.pop %v330
        %v345 = vmul.f32 %v344, 0.6931472
        %v346 = vlog2.pop %v331
        %v347 = vmul.f32 %v346, 0.6931472
        %v348 = vsub.f32 0.0, %v276
        %v349 = vsub.f32 0.0, %v277
        %v350 = vsub.f32 0.0, %v278
        %v351 = vsub.f32 0.0, %v279
        %v352 = vsub.f32 0.0, %v280
        %v353 = vsub.f32 0.0, %v281
        %v354 = vsub.f32 0.0, %v282
        %v355 = vsub.f32 0.0, %v283
        %v356 = vmax.f32 %v348, 0.0
        %v357 = vmax.f32 %v349, 0.0
        %v358 = vmax.f32 %v350, 0.0
        %v359 = vmax.f32 %v351, 0.0
        %v360 = vmax.f32 %v352, 0.0
        %v361 = vmax.f32 %v353, 0.0
        %v362 = vmax.f32 %v354, 0.0
        %v363 = vmax.f32 %v355, 0.0
        %v364 = vadd.f32 %v333, %v356
        %v365 = vadd.f32 %v335, %v357
        %v366 = vadd.f32 %v337, %v358
        %v367 = vadd.f32 %v339, %v359
        %v368 = vadd.f32 %v341, %v360
        %v369 = vadd.f32 %v343, %v361
        %v370 = vadd.f32 %v345, %v362
        %v371 = vadd.f32 %v347, %v363
        %vm372 = vcmp.ge.f32.partialorder %v276, 0.0
        %vm373 = vcmp.ge.f32.partialorder %v277, 0.0
        %vm374 = vcmp.ge.f32.partialorder %v278, 0.0
        %vm375 = vcmp.ge.f32.partialorder %v279, 0.0
        %vm376 = vcmp.ge.f32.partialorder %v280, 0.0
        %vm377 = vcmp.ge.f32.partialorder %v281, 0.0
        %vm378 = vcmp.ge.f32.partialorder %v282, 0.0
        %vm379 = vcmp.ge.f32.partialorder %v283, 0.0
        %v380 = vsel %vm372, 1.0, %v309
        %v381 = vsel %vm373, 1.0, %v311
        %v382 = vsel %vm374, 1.0, %v313
        %v383 = vsel %vm375, 1.0, %v315
        %v384 = vsel %vm376, 1.0, %v317
        %v385 = vsel %vm377, 1.0, %v319
        %v386 = vsel %vm378, 1.0, %v321
        %v387 = vsel %vm379, 1.0, %v323
        %v388 = vrcp.pop %v324
        %v389 = vmul.f32 %v380, %v388
        %v390 = vrcp.pop %v325
        %v391 = vmul.f32 %v381, %v390
        %v392 = vrcp.pop %v326
        %v393 = vmul.f32 %v382, %v392
        %v394 = vrcp.pop %v327
        %v395 = vmul.f32 %v383, %v394
        %v396 = vrcp.pop %v328
        %v397 = vmul.f32 %v384, %v396
        %v398 = vrcp.pop %v329
        %v399 = vmul.f32 %v385, %v398
        %v400 = vrcp.pop %v330
        %v401 = vmul.f32 %v386, %v400
        %v402 = vrcp.pop %v331
        %v403 = vmul.f32 %v387, %v402
        %v404 = vsub.f32 0.0, %v364
        %v405 = vsub.f32 0.0, %v365
        %v406 = vsub.f32 0.0, %v366
        %v407 = vsub.f32 0.0, %v367
        %v408 = vsub.f32 0.0, %v368
        %v409 = vsub.f32 0.0, %v369
        %v410 = vsub.f32 0.0, %v370
        %v411 = vsub.f32 0.0, %v371
        %v412 = vmax.f32 %v404, -27.631021
        %v413 = vmax.f32 %v405, -27.631021
        %v414 = vmax.f32 %v406, -27.631021
        %v415 = vmax.f32 %v407, -27.631021
        %v416 = vmax.f32 %v408, -27.631021
        %v417 = vmax.f32 %v409, -27.631021
        %v418 = vmax.f32 %v410, -27.631021
        %v419 = vmax.f32 %v411, -27.631021
        %v420 = vadd.f32 %v276, %v364
        %v421 = vadd.f32 %v277, %v365
        %v422 = vadd.f32 %v278, %v366
        %v423 = vadd.f32 %v279, %v367
        %v424 = vadd.f32 %v280, %v368
        %v425 = vadd.f32 %v281, %v369
        %v426 = vadd.f32 %v282, %v370
        %v427 = vadd.f32 %v283, %v371
        %v428 = vsub.f32 0.0, %v420
        %v429 = vsub.f32 0.0, %v421
        %v430 = vsub.f32 0.0, %v422
        %v431 = vsub.f32 0.0, %v423
        %v432 = vsub.f32 0.0, %v424
        %v433 = vsub.f32 0.0, %v425
        %v434 = vsub.f32 0.0, %v426
        %v435 = vsub.f32 0.0, %v427
        %vm436 = vcmp.eq.f32.partialorder %v284, 1.0
        %vm437 = vcmp.eq.f32.partialorder %v285, 1.0
        %vm438 = vcmp.eq.f32.partialorder %v286, 1.0
        %vm439 = vcmp.eq.f32.partialorder %v287, 1.0
        %vm440 = vcmp.eq.f32.partialorder %v288, 1.0
        %vm441 = vcmp.eq.f32.partialorder %v289, 1.0
        %vm442 = vcmp.eq.f32.partialorder %v290, 1.0
        %vm443 = vcmp.eq.f32.partialorder %v291, 1.0
        %v444 = vsub.f32 1.0, %v389
        %v445 = vsub.f32 1.0, %v391
        %v446 = vsub.f32 1.0, %v393
        %v447 = vsub.f32 1.0, %v395
        %v448 = vsub.f32 1.0, %v397
        %v449 = vsub.f32 1.0, %v399
        %v450 = vsub.f32 1.0, %v401
        %v451 = vsub.f32 1.0, %v403
        %v452 = vsub.f32 1.0, %v284
        %v453 = vsub.f32 1.0, %v285
        %v454 = vsub.f32 1.0, %v286
        %v455 = vsub.f32 1.0, %v287
        %v456 = vsub.f32 1.0, %v288
        %v457 = vsub.f32 1.0, %v289
        %v458 = vsub.f32 1.0, %v290
        %v459 = vsub.f32 1.0, %v291
        %v460 = vmul.f32 %v452, %v452
        %v461 = vmul.f32 %v453, %v453
        %v462 = vmul.f32 %v454, %v454
        %v463 = vmul.f32 %v455, %v455
        %v464 = vmul.f32 %v456, %v456
        %v465 = vmul.f32 %v457, %v457
        %v466 = vmul.f32 %v458, %v458
        %v467 = vmul.f32 %v459, %v459
        %v468 = vmul.f32 %v412, %v444
        %v469 = vmul.f32 %v413, %v445
        %v470 = vmul.f32 %v414, %v446
        %v471 = vmul.f32 %v415, %v447
        %v472 = vmul.f32 %v416, %v448
        %v473 = vmul.f32 %v417, %v449
        %v474 = vmul.f32 %v418, %v450
        %v475 = vmul.f32 %v419, %v451
        %v476 = vmul.f32 %v468, %v444
        %v477 = vmul.f32 %v469, %v445
        %v478 = vmul.f32 %v470, %v446
        %v479 = vmul.f32 %v471, %v447
        %v480 = vmul.f32 %v472, %v448
        %v481 = vmul.f32 %v473, %v449
        %v482 = vmul.f32 %v474, %v450
        %v483 = vmul.f32 %v475, %v451
        %v484 = vmul.f32 %v428, %v389
        %v485 = vmul.f32 %v429, %v391
        %v486 = vmul.f32 %v430, %v393
        %v487 = vmul.f32 %v431, %v395
        %v488 = vmul.f32 %v432, %v397
        %v489 = vmul.f32 %v433, %v399
        %v490 = vmul.f32 %v434, %v401
        %v491 = vmul.f32 %v435, %v403
        %v492 = vmul.f32 %v484, %v389
        %v493 = vmul.f32 %v485, %v391
        %v494 = vmul.f32 %v486, %v393
        %v495 = vmul.f32 %v487, %v395
        %v496 = vmul.f32 %v488, %v397
        %v497 = vmul.f32 %v489, %v399
        %v498 = vmul.f32 %v490, %v401
        %v499 = vmul.f32 %v491, %v403
        %v500 = vmul.f32 %v492, %v460
        %v501 = vmul.f32 %v493, %v461
        %v502 = vmul.f32 %v494, %v462
        %v503 = vmul.f32 %v495, %v463
        %v504 = vmul.f32 %v496, %v464
        %v505 = vmul.f32 %v497, %v465
        %v506 = vmul.f32 %v498, %v466
        %v507 = vmul.f32 %v499, %v467
        %v508 = vmul.f32 %v500, %v460
        %v509 = vmul.f32 %v501, %v461
        %v510 = vmul.f32 %v502, %v462
        %v511 = vmul.f32 %v503, %v463
        %v512 = vmul.f32 %v504, %v464
        %v513 = vmul.f32 %v505, %v465
        %v514 = vmul.f32 %v506, %v466
        %v515 = vmul.f32 %v507, %v467
        %v516 = vsel %vm436, %v476, %v508
        %v517 = vsel %vm437, %v477, %v509
        %v518 = vsel %vm438, %v478, %v510
        %v519 = vsel %vm439, %v479, %v511
        %v520 = vsel %vm440, %v480, %v512
        %v521 = vsel %vm441, %v481, %v513
        %v522 = vsel %vm442, %v482, %v514
        %v523 = vsel %vm443, %v483, %v515
        %v524 = vld [vmem:[%s246] ss:$8 sm:$0xf]
        %v525 = vld [vmem:[%s246] ss:$8 sm:$0xf0]
        %v526 = vor.u32 %v524, %v525
        %v527 = vrot.slane %v516, 4
        %v528 = vadd.f32 %v516, %v527
        %v529 = vrot.slane %v528, 2
        %v530 = vadd.f32 %v528, %v529
        %v531 = vrot.slane %v530, 1
        %v532 = vadd.f32 %v530, %v531
        %v533 = vrot.slane %v517, 4
        %v534 = vadd.f32 %v517, %v533
        %v535 = vrot.slane %v534, 2
        %v536 = vadd.f32 %v534, %v535
        %v537 = vrot.slane %v536, 1
        %v538 = vadd.f32 %v536, %v537
        %v539 = vrot.slane %v518, 4
        %v540 = vadd.f32 %v518, %v539
        %v541 = vrot.slane %v540, 2
        %v542 = vadd.f32 %v540, %v541
        %v543 = vrot.slane %v542, 1
        %v544 = vadd.f32 %v542, %v543
        %v545 = vrot.slane %v519, 4
        %v546 = vadd.f32 %v519, %v545
        %v547 = vrot.slane %v546, 2
        %v548 = vadd.f32 %v546, %v547
        %v549 = vrot.slane %v548, 1
        %v550 = vadd.f32 %v548, %v549
        %v551 = vrot.slane %v520, 4
        %v552 = vadd.f32 %v520, %v551
        %v553 = vrot.slane %v552, 2
        %v554 = vadd.f32 %v552, %v553
        %v555 = vrot.slane %v554, 1
        %v556 = vadd.f32 %v554, %v555
        %v557 = vrot.slane %v521, 4
        %v558 = vadd.f32 %v521, %v557
        %v559 = vrot.slane %v558, 2
        %v560 = vadd.f32 %v558, %v559
        %v561 = vrot.slane %v560, 1
        %v562 = vadd.f32 %v560, %v561
        %v563 = vrot.slane %v522, 4
        %v564 = vadd.f32 %v522, %v563
        %v565 = vrot.slane %v564, 2
        %v566 = vadd.f32 %v564, %v565
        %v567 = vrot.slane %v566, 1
        %v568 = vadd.f32 %v566, %v567
        %v569 = vrot.slane %v523, 4
        %v570 = vadd.f32 %v523, %v569
        %v571 = vrot.slane %v570, 2
        %v572 = vadd.f32 %v570, %v571
        %v573 = vrot.slane %v572, 1
        %v574 = vadd.f32 %v572, %v573
        %v583 = vcombine.low %v532, %v538
        %v584 = vcombine.low %v544, %v550
        %v585 = vcombine.low %v556, %v562
        %v586 = vcombine.low %v568, %v574
        %v588 = vunpack.c.l.s4 1966171168
        %v589 = vunpack.c.0.s8 %v588
        %v590 = vlaneseq
        %v591 = vshrl.u32 %v590, 7
        %v592 = vsub.s32 %v589, %v591
        %v593 = vrot.slane %v583, %v592
        %v595 = vunpack.c.l.s4 1966171168
        %v596 = vunpack.c.0.s8 %v595
        %v597 = vlaneseq
        %v598 = vshrl.u32 %v597, 7
        %v599 = vsub.s32 %v596, %v598
        %v600 = vrot.slane %v584, %v599
        %v602 = vunpack.c.l.s4 1966171168
        %v603 = vunpack.c.0.s8 %v602
        %v604 = vlaneseq
        %v605 = vshrl.u32 %v604, 7
        %v606 = vsub.s32 %v603, %v605
        %v607 = vrot.slane %v585, %v606
        %v609 = vunpack.c.l.s4 1966171168
        %v610 = vunpack.c.0.s8 %v609
        %v611 = vlaneseq
        %v612 = vshrl.u32 %v611, 7
        %v613 = vsub.s32 %v610, %v612
        %v614 = vrot.slane %v586, %v613
        %v615 = vcombine.low %v593, %v600
        %v616 = vcombine.low %v607, %v614
        %v618 = vunpack.c.l.s4 1966171168
        %v619 = vunpack.c.0.s8 %v618
        %v620 = vlaneseq
        %v621 = vshrl.u32 %v620, 7
        %v622 = vsub.s32 %v619, %v621
        %v623 = vrot.slane %v615, %v622
        %v625 = vunpack.c.l.s4 1966171168
        %v626 = vunpack.c.0.s8 %v625
        %v627 = vlaneseq
        %v628 = vshrl.u32 %v627, 7
        %v629 = vsub.s32 %v626, %v628
        %v630 = vrot.slane %v616, %v629
        %v631 = vcombine.low %v623, %v630
        %v633 = vadd.f32 %v526, %v631
        %634 = vst [vmem:[%s246] ss:$8 sm:$0xf] %v633
        %635 = vst [vmem:[%s246] ss:$8 sm:$0xf0] %v633
        %v636 = vld [vmem:[%s253] ss:$8 sm:$0xf]
        %v637 = vld [vmem:[%s253] ss:$8 sm:$0xf0]
        %v638 = vor.u32 %v636, %v637
        %v639 = vsel %vm436, 1, 0
        %v640 = vsel %vm437, 1, 0
        %v641 = vsel %vm438, 1, 0
        %v642 = vsel %vm439, 1, 0
        %v643 = vsel %vm440, 1, 0
        %v644 = vsel %vm441, 1, 0
        %v645 = vsel %vm442, 1, 0
        %v646 = vsel %vm443, 1, 0
        %v647 = vcvt.s32.f32 %v639
        %v648 = vcvt.s32.f32 %v640
        %v649 = vcvt.s32.f32 %v641
        %v650 = vcvt.s32.f32 %v642
        %v651 = vcvt.s32.f32 %v643
        %v652 = vcvt.s32.f32 %v644
        %v653 = vcvt.s32.f32 %v645
        %v654 = vcvt.s32.f32 %v646
        %v655 = vrot.slane %v647, 4
        %v656 = vadd.f32 %v647, %v655
        %v657 = vrot.slane %v656, 2
        %v658 = vadd.f32 %v656, %v657
        %v659 = vrot.slane %v658, 1
        %v660 = vadd.f32 %v658, %v659
        %v661 = vrot.slane %v648, 4
        %v662 = vadd.f32 %v648, %v661
        %v663 = vrot.slane %v662, 2
        %v664 = vadd.f32 %v662, %v663
        %v665 = vrot.slane %v664, 1
        %v666 = vadd.f32 %v664, %v665
        %v667 = vrot.slane %v649, 4
        %v668 = vadd.f32 %v649, %v667
        %v669 = vrot.slane %v668, 2
        %v670 = vadd.f32 %v668, %v669
        %v671 = vrot.slane %v670, 1
        %v672 = vadd.f32 %v670, %v671
        %v673 = vrot.slane %v650, 4
        %v674 = vadd.f32 %v650, %v673
        %v675 = vrot.slane %v674, 2
        %v676 = vadd.f32 %v674, %v675
        %v677 = vrot.slane %v676, 1
        %v678 = vadd.f32 %v676, %v677
        %v679 = vrot.slane %v651, 4
        %v680 = vadd.f32 %v651, %v679
        %v681 = vrot.slane %v680, 2
        %v682 = vadd.f32 %v680, %v681
        %v683 = vrot.slane %v682, 1
        %v684 = vadd.f32 %v682, %v683
        %v685 = vrot.slane %v652, 4
        %v686 = vadd.f32 %v652, %v685
        %v687 = vrot.slane %v686, 2
        %v688 = vadd.f32 %v686, %v687
        %v689 = vrot.slane %v688, 1
        %v690 = vadd.f32 %v688, %v689
        %v691 = vrot.slane %v653, 4
        %v692 = vadd.f32 %v653, %v691
        %v693 = vrot.slane %v692, 2
        %v694 = vadd.f32 %v692, %v693
        %v695 = vrot.slane %v694, 1
        %v696 = vadd.f32 %v694, %v695
        %v697 = vrot.slane %v654, 4
        %v698 = vadd.f32 %v654, %v697
        %v699 = vrot.slane %v698, 2
        %v700 = vadd.f32 %v698, %v699
        %v701 = vrot.slane %v700, 1
        %v702 = vadd.f32 %v700, %v701
        %v711 = vcombine.low %v660, %v666
        %v712 = vcombine.low %v672, %v678
        %v713 = vcombine.low %v684, %v690
        %v714 = vcombine.low %v696, %v702
        %v716 = vunpack.c.l.s4 1966171168
        %v717 = vunpack.c.0.s8 %v716
        %v718 = vlaneseq
        %v719 = vshrl.u32 %v718, 7
        %v720 = vsub.s32 %v717, %v719
        %v721 = vrot.slane %v711, %v720
        %v723 = vunpack.c.l.s4 1966171168
        %v724 = vunpack.c.0.s8 %v723
        %v725 = vlaneseq
        %v726 = vshrl.u32 %v725, 7
        %v727 = vsub.s32 %v724, %v726
        %v728 = vrot.slane %v712, %v727
        %v730 = vunpack.c.l.s4 1966171168
        %v731 = vunpack.c.0.s8 %v730
        %v732 = vlaneseq
        %v733 = vshrl.u32 %v732, 7
        %v734 = vsub.s32 %v731, %v733
        %v735 = vrot.slane %v713, %v734
        %v737 = vunpack.c.l.s4 1966171168
        %v738 = vunpack.c.0.s8 %v737
        %v739 = vlaneseq
        %v740 = vshrl.u32 %v739, 7
        %v741 = vsub.s32 %v738, %v740
        %v742 = vrot.slane %v714, %v741
        %v743 = vcombine.low %v721, %v728
        %v744 = vcombine.low %v735, %v742
        %v746 = vunpack.c.l.s4 1966171168
        %v747 = vunpack.c.0.s8 %v746
        %v748 = vlaneseq
        %v749 = vshrl.u32 %v748, 7
        %v750 = vsub.s32 %v747, %v749
        %v751 = vrot.slane %v743, %v750
        %v753 = vunpack.c.l.s4 1966171168
        %v754 = vunpack.c.0.s8 %v753
        %v755 = vlaneseq
        %v756 = vshrl.u32 %v755, 7
        %v757 = vsub.s32 %v754, %v756
        %v758 = vrot.slane %v744, %v757
        %v759 = vcombine.low %v751, %v758
        %v761 = vadd.f32 %v638, %v759
        %762 = vst [vmem:[%s253] ss:$8 sm:$0xf] %v761
        %763 = vst [vmem:[%s253] ss:$8 sm:$0xf0] %v761
        %s764 = sand.u32 %s103, 1
        %s765 = scalar_lea.sflag [#allocation4], %s764
        %s766 = sand.u32 %s103, 1
        %s767 = smul.addr %s766, 64
        %s768 = scalar_lea.vmem [#allocation7], %s767
        %s769 = sand.u32 %s129, 1
        %s770 = scalar_lea.sflag [#allocation9], %s769
        %s771 = sand.u32 %s129, 1
        %s772 = smul.addr %s771, 64
        %s773 = scalar_lea.vmem [#allocation8], %s772
        // Predicated region
        $region41: #{tpu_custom_call.1} parent=27 // pred_check
          %p774 = pneg %p113
        $region42: #{tpu_custom_call.1} parent=27 // pred_check_branch
          %776 = sbr.rel (%p774) target = $region44
        $region43: #{tpu_custom_call.1} parent=27 // pred_region
          %s778 = ssub.s32 1024, 1024
          %779 = vsyncadd %s765, %s778
          %s780 = smul.addr %s31, 8
          %s781 = smul.addr %s780, 128
          %s782 = scalar_lea.hbm %s2, %s781
          %s784 = sshll.u32 %s768, 4
          %s785 = int_to_ptr.vmem [resolvable:$true] %s784
          %787 = dma.vmem_to_hbm [thread:$0]  %s785, 1024, %s782, %s765
        $region44: #{tpu_custom_call.1} parent=27 // pred_fallthru
          _
        // Predicated region
        $region45: #{tpu_custom_call.1} parent=27 // pred_check
          %p788 = pneg %p139
        $region46: #{tpu_custom_call.1} parent=27 // pred_check_branch
          %790 = sbr.rel (%p788) target = $region48
        $region47: #{tpu_custom_call.1} parent=27 // pred_region
          %s792 = ssub.s32 1024, 1024
          %793 = vsyncadd %s770, %s792
          %s794 = smul.addr %s31, 8
          %s795 = smul.addr %s794, 128
          %s796 = scalar_lea.hbm %s3, %s795
          %s798 = sshll.u32 %s773, 4
          %s799 = int_to_ptr.vmem [resolvable:$true] %s798
          %801 = dma.vmem_to_hbm [thread:$0]  %s799, 1024, %s796, %s770
        $region48: #{tpu_custom_call.1} parent=27 // pred_fallthru
          _
      $region28: #{tpu_custom_call.1} parent=5 // pred_fallthru
        _
      %p802 = scmp.le.s32.totalorder 2, %s22
      // Predicated region
      $region49: #{tpu_custom_call.1} parent=5 // pred_check
        %p803 = pneg %p802
      $region50: #{tpu_custom_call.1} parent=5 // pred_check_branch
        %805 = sbr.rel (%p803) target = $region52
      $region51: #{tpu_custom_call.1} parent=5 // pred_region
        %s806 = ssub.s32 %s22, 2
        // Predicated region
        $region53: #{tpu_custom_call.1} parent=51 // pred_check
          %p807 = pneg %p119
        $region54: #{tpu_custom_call.1} parent=51 // pred_check_branch
          %809 = sbr.rel (%p807) target = $region56
        $region55: #{tpu_custom_call.1} parent=51 // pred_region
          %s810 = sand.u32 %s104, 1
          %s811 = scalar_lea.sflag [#allocation4], %s810
          %s812 = sand.u32 %s104, 1
          %s813 = smul.addr %s812, 64
          %s814 = scalar_lea.vmem [#allocation7], %s813
          %815 = dma.done %s811, 1024
        $region56: #{tpu_custom_call.1} parent=51 // pred_fallthru
          _
        // Predicated region
        $region57: #{tpu_custom_call.1} parent=51 // pred_check
          %p816 = pneg %p145
        $region58: #{tpu_custom_call.1} parent=51 // pred_check_branch
          %818 = sbr.rel (%p816) target = $region60
        $region59: #{tpu_custom_call.1} parent=51 // pred_region
          %s819 = sand.u32 %s130, 1
          %s820 = scalar_lea.sflag [#allocation9], %s819
          %s821 = sand.u32 %s130, 1
          %s822 = smul.addr %s821, 64
          %s823 = scalar_lea.vmem [#allocation8], %s822
          %824 = dma.done %s820, 1024
        $region60: #{tpu_custom_call.1} parent=51 // pred_fallthru
          _
      $region52: #{tpu_custom_call.1} parent=5 // pred_fallthru
        _
    $region6: #{tpu_custom_call.1} parent=1 // loop_footer
      %s26 = sadd.s32 1, %s22
    $region7: #{tpu_custom_call.1} parent=1 // loop_footer_branch
      %21 = sbr.rel target = $region3
    $region8: #{tpu_custom_call.1} parent=1 // loop_exit
      _
    %825 = vsyncpa [#allocation3], 1
    %s826 = scalar_lea.sflag [#allocation3], 1
    %827 = vsyncpa %s826, 1
    %828 = vsyncpa [#allocation6], 1
    %s829 = scalar_lea.sflag [#allocation6], 1
    %830 = vsyncpa %s829, 1
    %831 = vsyncpa [#allocation4], 1
    %s832 = scalar_lea.sflag [#allocation4], 1
    %833 = vsyncpa %s832, 1
    %834 = vsyncpa [#allocation9], 1
    %s835 = scalar_lea.sflag [#allocation9], 1
    %836 = vsyncpa %s835, 1

</llo_original>
